<compile_context>
chip_gen: v5e
topology: v5e:2x2
jax: 0.10.0
libtpu: 0.0.40
codegen_flags: <defaults>
</compile_context>

<pallas_src>
import math

import jax
import jax.numpy as jnp
from jax.experimental import pallas as pl
from jax.experimental.pallas import tpu as pltpu

LN_EPS = 1e-5
_INV_SQRT2 = 1.0 / math.sqrt(2.0)


# --------------------------------------------------------------------------
# kernel helpers (run on VPU/EUP in f32)
# --------------------------------------------------------------------------
def _layernorm_f32(x_ref, gamma_ref, beta_ref):
    x = x_ref[...].astype(jnp.float32)
    mean = jnp.mean(x, axis=-1, keepdims=True)
    var = jnp.mean(jnp.square(x - mean), axis=-1, keepdims=True)
    xn = (x - mean) * jax.lax.rsqrt(var + LN_EPS)
    return xn * gamma_ref[...].astype(jnp.float32) + beta_ref[...].astype(jnp.float32)


def _gelu_erf(h):
    # exact-erf GELU (matches torch.nn.GELU() default)
    return 0.5 * h * (1.0 + jax.lax.erf(h * _INV_SQRT2))


# --------------------------------------------------------------------------
# kernels
# --------------------------------------------------------------------------
def _ff_kernel_resident(x_ref, gamma_ref, beta_ref, w1_ref, b1_ref, w2_ref,
                        b2_ref, o_ref):
    """Weights fully VMEM-resident: single pass per row tile, 1-D grid."""
    xn = _layernorm_f32(x_ref, gamma_ref, beta_ref).astype(jnp.bfloat16)
    h = jnp.dot(xn, w1_ref[...], preferred_element_type=jnp.float32)
    h = _gelu_erf(h + b1_ref[...].astype(jnp.float32))
    out = jnp.dot(h.astype(jnp.bfloat16), w2_ref[...],
                  preferred_element_type=jnp.float32)
    o_ref[...] = (out + b2_ref[...].astype(jnp.float32)).astype(o_ref.dtype)


def _ff_kernel_tiled_accout(x_ref, gamma_ref, beta_ref, w1_ref, b1_ref,
                            w2_ref, b2_ref, o_ref, xn_ref):
    """Hidden-axis tiled; the f32 output block is itself the accumulator."""
    h_idx = pl.program_id(1)

    @pl.when(h_idx == 0)
    def _():
        xn_ref[...] = _layernorm_f32(x_ref, gamma_ref, beta_ref).astype(jnp.bfloat16)
        # fold b2 into the accumulator init (saves a last-step add)
        o_ref[...] = jnp.broadcast_to(b2_ref[...].astype(jnp.float32), o_ref.shape)

    h = jnp.dot(xn_ref[...], w1_ref[...], preferred_element_type=jnp.float32)
    h = _gelu_erf(h + b1_ref[...].astype(jnp.float32))
    o_ref[...] += jnp.dot(h.astype(jnp.bfloat16), w2_ref[...],
                          preferred_element_type=jnp.float32)


def _ff_kernel_tiled_scratch(x_ref, gamma_ref, beta_ref, w1_ref, b1_ref,
                             w2_ref, b2_ref, o_ref, xn_ref, acc_ref):
    """Hidden-axis tiled; non-f32 output -> separate f32 accumulator scratch."""
    h_idx = pl.program_id(1)

    @pl.when(h_idx == 0)
    def _():
        xn_ref[...] = _layernorm_f32(x_ref, gamma_ref, beta_ref).astype(jnp.bfloat16)
        acc_ref[...] = jnp.broadcast_to(b2_ref[...].astype(jnp.float32), acc_ref.shape)

    h = jnp.dot(xn_ref[...], w1_ref[...], preferred_element_type=jnp.float32)
    h = _gelu_erf(h + b1_ref[...].astype(jnp.float32))
    acc_ref[...] += jnp.dot(h.astype(jnp.bfloat16), w2_ref[...],
                            preferred_element_type=jnp.float32)

    @pl.when(h_idx == pl.num_programs(1) - 1)
    def _():
        o_ref[...] = acc_ref[...].astype(o_ref.dtype)


# --------------------------------------------------------------------------
# wrapper
# --------------------------------------------------------------------------
def _round_up(x, m):
    return ((x + m - 1) // m) * m


def _cdiv(a, b):
    return -(-a // b)


def _pick_hidden_tile(hidden, target):
    """Largest 256- (preferred) or 128-multiple <= target dividing hidden."""
    for step in (256, 128):
        if hidden % step == 0 and target >= step:
            t = min(max((target // step) * step, step), hidden)
            while t > step and hidden % t != 0:
                t -= step
            if hidden % t == 0:
                return t
    if hidden % 128 == 0:
        return 128
    return hidden  # non-128-aligned hidden: fall back to a single full block


def _footprint_bytes(tm, th, dim, xb, ob):
    """Rough VMEM footprint: double-buffered tiles + scratch + temporaries."""
    return (2 * tm * dim * xb                   # x row tiles
            + 2 * tm * dim * ob                 # output tiles
            + 2 * 2 * (dim * th + th * dim)     # bf16 w1/w2 tiles (double-buffered)
            + 2 * 4 * (3 * dim + th)            # gamma/beta/b1/b2 tiles
            + tm * dim * 4                      # f32 LN temp / accumulator
            + tm * dim * 2                      # bf16 LN cache
            + tm * th * 4                       # f32 hidden intermediate
            + tm * th * 2)                      # bf16 cast of intermediate


def feedforward_pallas(x, params, *, tm=None, th=None):
    """x: (..., dim). Returns same shape/dtype as x."""
    gamma, beta = params["ln_gamma"], params["ln_beta"]
    w1, b1, w2, b2 = params["w1"], params["b1"], params["w2"], params["b2"]

    dim = x.shape[-1]
    hidden = w1.shape[1]
    orig_shape = x.shape

    x2d = x.reshape(-1, dim)
    m = x2d.shape[0]
    out_dtype = x.dtype
    xb = jnp.dtype(x.dtype).itemsize
    ob = jnp.dtype(out_dtype).itemsize

    # ---- generation-aware VMEM budget (v5e/v6e: 128 MiB, v7x: 64 MiB) ----
    try:
        vmem_cap = int(pltpu.get_tpu_info().vmem_capacity_bytes)
    except Exception:
        vmem_cap = 64 * 1024 * 1024  # conservative fallback valid on all chips
    vmem_budget = min(int(vmem_cap * 0.84), vmem_cap - 8 * 1024 * 1024)

    # ---- hidden axis: keep bf16 weights fully VMEM-resident when they fit ----
    w_resident_bytes = 2 * 2 * (dim * hidden + hidden * dim)  # double-buffered bf16
    resident = (th is None or th >= hidden) and (w_resident_bytes <= vmem_budget // 2)
    if resident:
        th_eff = hidden
    else:
        th_eff = _pick_hidden_tile(hidden, 1024 if th is None else th)
        if hidden % 128 == 0:
            while th_eff > 128 and _footprint_bytes(16, th_eff, dim, xb, ob) > vmem_budget:
                th_eff = _pick_hidden_tile(hidden, th_eff - 128)

    # ---- row tile: as large as VMEM allows (weight-streaming arithmetic
    #      intensity == tm flops/byte; v6e/v7x breakeven ~620-680) ----
    if tm is None:
        tm = 1024
    tm = max(16, (min(tm, _round_up(m, 16)) // 16) * 16)
    while tm > 16 and _footprint_bytes(tm, th_eff, dim, xb, ob) > vmem_budget:
        tm = max(16, ((tm - 128) // 16) * 16) if tm > 128 else 16
    # v7x megacore: make sure the "parallel" row axis has >= 2 tiles when possible
    if _cdiv(m, tm) == 1 and m > 16:
        tm = max(16, _round_up(_cdiv(m, 2), 16))

    est = _footprint_bytes(tm, th_eff, dim, xb, ob)
    vmem_limit = int(min(max(est * 3 // 2, 32 * 1024 * 1024), vmem_budget))

    # 1-D params presented as (1, D) so the last dim maps onto lanes.
    gamma2 = gamma.reshape(1, dim)
    beta2 = beta.reshape(1, dim)
    b1_2 = b1.reshape(1, hidden)
    b2_2 = b2.reshape(1, dim)

    # bf16 weights: native MXU input dtype; half the HBM/VMEM bytes of f32.
    # TODO(synk): on v7x, fp8 (e4m3) weights + per-channel dequant scales would
    # halve weight traffic again; not implemented here.
    w1_bf = w1.astype(jnp.bfloat16)
    w2_bf = w2.astype(jnp.bfloat16)

    if resident:
        grid = (_cdiv(m, tm),)
        in_specs = [
            pl.BlockSpec((tm, dim), lambda i: (i, 0)),       # x row tile
            pl.BlockSpec((1, dim), lambda i: (0, 0)),        # ln gamma
            pl.BlockSpec((1, dim), lambda i: (0, 0)),        # ln beta
            pl.BlockSpec((dim, hidden), lambda i: (0, 0)),   # w1 (resident, DMA'd once)
            pl.BlockSpec((1, hidden), lambda i: (0, 0)),     # b1
            pl.BlockSpec((hidden, dim), lambda i: (0, 0)),   # w2 (resident, DMA'd once)
            pl.BlockSpec((1, dim), lambda i: (0, 0)),        # b2
        ]
        out_specs = pl.BlockSpec((tm, dim), lambda i: (i, 0))
        scratch_shapes = []
        kernel = _ff_kernel_resident
        dim_sem = ("parallel",)
    else:
        grid = (_cdiv(m, tm), hidden // th_eff)
        in_specs = [
            pl.BlockSpec((tm, dim), lambda i, h: (i, 0)),    # x row tile
            pl.BlockSpec((1, dim), lambda i, h: (0, 0)),     # ln gamma
            pl.BlockSpec((1, dim), lambda i, h: (0, 0)),     # ln beta
            pl.BlockSpec((dim, th_eff), lambda i, h: (0, h)),  # w1 column block
            pl.BlockSpec((1, th_eff), lambda i, h: (0, h)),    # b1 block
            pl.BlockSpec((th_eff, dim), lambda i, h: (h, 0)),  # w2 row block
            pl.BlockSpec((1, dim), lambda i, h: (0, 0)),       # b2
        ]
        out_specs = pl.BlockSpec((tm, dim), lambda i, h: (i, 0))
        if jnp.dtype(out_dtype) == jnp.float32:
            # f32 output block doubles as the accumulator: no f32 scratch needed.
            scratch_shapes = [pltpu.VMEM((tm, dim), jnp.bfloat16)]
            kernel = _ff_kernel_tiled_accout
        else:
            scratch_shapes = [pltpu.VMEM((tm, dim), jnp.bfloat16),
                              pltpu.VMEM((tm, dim), jnp.float32)]
            kernel = _ff_kernel_tiled_scratch
        dim_sem = ("parallel", "arbitrary")

    out = pl.pallas_call(
        kernel,
        out_shape=jax.ShapeDtypeStruct((m, dim), out_dtype),
        grid_spec=pltpu.PrefetchScalarGridSpec(
            num_scalar_prefetch=0,
            grid=grid,
            in_specs=in_specs,
            out_specs=out_specs,
            scratch_shapes=scratch_shapes,
        ),
        compiler_params=pltpu.CompilerParams(
            dimension_semantics=dim_sem,
            vmem_limit_bytes=vmem_limit,
        ),
    )(x2d, gamma2, beta2, w1_bf, b1_2, w2_bf, b2_2)

    return out.reshape(orig_shape)


# --------------------------------------------------------------------------
# params + reference
# --------------------------------------------------------------------------
def init_params(key, dim, hidden_dim, dtype=jnp.float32):
    """Deterministic init mirroring the PyTorch module's parameter shapes."""
    k1, k2, k3, k4 = jax.random.split(key, 4)
    lim1 = 1.0 / math.sqrt(dim)
    lim2 = 1.0 / math.sqrt(hidden_dim)
    return {
        "ln_gamma": jnp.ones((dim,), dtype),
        "ln_beta": jnp.zeros((dim,), dtype),
        # stored as (in, out) so the kernel does x @ w1 directly
        "w1": jax.random.uniform(k1, (dim, hidden_dim), dtype, -lim1, lim1),
        "b1": jax.random.uniform(k2, (hidden_dim,), dtype, -lim1, lim1),
        "w2": jax.random.uniform(k3, (hidden_dim, dim), dtype, -lim2, lim2),
        "b2": jax.random.uniform(k4, (dim,), dtype, -lim2, lim2),
    }


def _reference(x, p):
    """Pure-JAX f32 reference for sanity checking."""
    xf = x.astype(jnp.float32)
    mean = jnp.mean(xf, axis=-1, keepdims=True)
    var = jnp.mean(jnp.square(xf - mean), axis=-1, keepdims=True)
    xn = (xf - mean) * jax.lax.rsqrt(var + LN_EPS) * p["ln_gamma"] + p["ln_beta"]
    h = xn @ p["w1"] + p["b1"]
    h = 0.5 * h * (1.0 + jax.lax.erf(h * _INV_SQRT2))
    return (h @ p["w2"] + p["b2"]).astype(x.dtype)


if __name__ == "__main__":
    key = jax.random.PRNGKey(0)
    kx, kp = jax.random.split(key)

    # Small but lane-dense shapes (dim/hidden multiples of 128).
    B, N, DIM, HIDDEN = 2, 8, 128, 512
    x = jax.random.normal(kx, (B, N, DIM), dtype=jnp.float32)
    params = init_params(kp, DIM, HIDDEN)
    y_ref = _reference(x, params)

    # 1) default path: bf16 weights fully VMEM-resident (single hidden step).
    y = jax.block_until_ready(feedforward_pallas(x, params))
    assert y.shape == x.shape and y.dtype == x.dtype
    assert jnp.allclose(y, y_ref, atol=3e-2, rtol=3e-2), "resident path mismatch"

    # 2) forced hidden-axis tiling (4 accumulation steps; f32 output is the
    #    accumulator), exercising the tiled/accumulate path.
    y_t = jax.block_until_ready(feedforward_pallas(x, params, th=128))
    assert jnp.allclose(y_t, y_ref, atol=3e-2, rtol=3e-2), "tiled path mismatch"

    # 3) bf16 activations/output exercise the scratch-accumulator tiled kernel.
    x_bf = x.astype(jnp.bfloat16)
    y_bf = jax.block_until_ready(feedforward_pallas(x_bf, params, th=128))
    y_bf_ref = _reference(x_bf, params)
    assert y_bf.dtype == jnp.bfloat16
    assert jnp.allclose(y_bf.astype(jnp.float32), y_bf_ref.astype(jnp.float32),
                        atol=8e-2, rtol=8e-2), "bf16 tiled path mismatch"

    print("KERNEL_OK")
</pallas_src>

<mosaic_0001>
module attributes {stable_mosaic.version = 11 : i64} {
  func.func @_ff_kernel_resident(%arg0: i32, %arg1: memref<16x128xf32, #tpu.memory_space<vmem>>, %arg2: memref<1x128xf32, #tpu.memory_space<vmem>>, %arg3: memref<1x128xf32, #tpu.memory_space<vmem>>, %arg4: memref<128x512xbf16, #tpu.memory_space<vmem>>, %arg5: memref<1x512xf32, #tpu.memory_space<vmem>>, %arg6: memref<512x128xbf16, #tpu.memory_space<vmem>>, %arg7: memref<1x128xf32, #tpu.memory_space<vmem>>, %arg8: memref<16x128xf32, #tpu.memory_space<vmem>>) attributes {dimension_semantics = [#tpu.dimension_semantics<parallel>], iteration_bounds = array<i64: 1>, scalar_prefetch = 0 : i64, scratch_operands = 0 : i64, tpu.core_type = #tpu.core_type<tc>, window_params = [{transform_indices = @transform_0, window_bounds = array<i64: 16, 128>}, {pipeline_mode = #tpu.pipeline_mode<synchronous>, transform_indices = @transform_1, window_bounds = array<i64: 1, 128>}, {pipeline_mode = #tpu.pipeline_mode<synchronous>, transform_indices = @transform_2, window_bounds = array<i64: 1, 128>}, {pipeline_mode = #tpu.pipeline_mode<synchronous>, transform_indices = @transform_3, window_bounds = array<i64: 128, 512>}, {pipeline_mode = #tpu.pipeline_mode<synchronous>, transform_indices = @transform_4, window_bounds = array<i64: 1, 512>}, {pipeline_mode = #tpu.pipeline_mode<synchronous>, transform_indices = @transform_5, window_bounds = array<i64: 512, 128>}, {pipeline_mode = #tpu.pipeline_mode<synchronous>, transform_indices = @transform_6, window_bounds = array<i64: 1, 128>}, {transform_indices = @transform_7, window_bounds = array<i64: 16, 128>}]} {
    %c0 = arith.constant 0 : index
    %c0_0 = arith.constant 0 : index
    %0 = vector.load %arg1[%c0, %c0_0] : memref<16x128xf32, #tpu.memory_space<vmem>>, vector<16x128xf32>
    %cst = arith.constant dense<0.000000e+00> : vector<16xf32>
    %1 = vector.multi_reduction <add>, %0, %cst [1] : vector<16x128xf32> to vector<16xf32>
    %2 = vector.shape_cast %1 : vector<16xf32> to vector<16x1xf32>
    %cst_1 = arith.constant 1.280000e+02 : f32
    %3 = vector.broadcast %cst_1 : f32 to vector<16x1xf32>
    %4 = arith.divf %2, %3 : vector<16x1xf32>
    %5 = vector.broadcast %4 : vector<16x1xf32> to vector<16x128xf32>
    %6 = arith.subf %0, %5 : vector<16x128xf32>
    %7 = arith.mulf %6, %6 : vector<16x128xf32>
    %cst_2 = arith.constant dense<0.000000e+00> : vector<16xf32>
    %8 = vector.multi_reduction <add>, %7, %cst_2 [1] : vector<16x128xf32> to vector<16xf32>
    %9 = vector.shape_cast %8 : vector<16xf32> to vector<16x1xf32>
    %cst_3 = arith.constant 1.280000e+02 : f32
    %10 = vector.broadcast %cst_3 : f32 to vector<16x1xf32>
    %11 = arith.divf %9, %10 : vector<16x1xf32>
    %12 = vector.broadcast %4 : vector<16x1xf32> to vector<16x128xf32>
    %13 = arith.subf %0, %12 : vector<16x128xf32>
    %cst_4 = arith.constant 9.99999974E-6 : f32
    %14 = vector.broadcast %cst_4 : f32 to vector<16x1xf32>
    %15 = arith.addf %11, %14 : vector<16x1xf32>
    %16 = math.rsqrt %15 : vector<16x1xf32>
    %17 = vector.broadcast %16 : vector<16x1xf32> to vector<16x128xf32>
    %18 = arith.mulf %13, %17 : vector<16x128xf32>
    %c0_5 = arith.constant 0 : index
    %c0_6 = arith.constant 0 : index
    %19 = vector.load %arg2[%c0_5, %c0_6] : memref<1x128xf32, #tpu.memory_space<vmem>>, vector<1x128xf32>
    %20 = vector.broadcast %19 : vector<1x128xf32> to vector<16x128xf32>
    %21 = arith.mulf %18, %20 : vector<16x128xf32>
    %c0_7 = arith.constant 0 : index
    %c0_8 = arith.constant 0 : index
    %22 = vector.load %arg3[%c0_7, %c0_8] : memref<1x128xf32, #tpu.memory_space<vmem>>, vector<1x128xf32>
    %23 = vector.broadcast %22 : vector<1x128xf32> to vector<16x128xf32>
    %24 = arith.addf %21, %23 : vector<16x128xf32>
    %25 = arith.truncf %24 : vector<16x128xf32> to vector<16x128xbf16>
    %c0_9 = arith.constant 0 : index
    %c0_10 = arith.constant 0 : index
    %26 = vector.load %arg4[%c0_9, %c0_10] : memref<128x512xbf16, #tpu.memory_space<vmem>>, vector<128x512xbf16>
    %cst_11 = arith.constant dense<0.000000e+00> : vector<16x512xf32>
    %27 = tpu.matmul %25, %26, %cst_11 {dimension_numbers = #tpu.dot_dimension_numbers<[1], [0], [0], [1], [0, 0, 1, 1], [], []>} : vector<16x128xbf16>, vector<128x512xbf16>, vector<16x512xf32> -> vector<16x512xf32>
    %c0_12 = arith.constant 0 : index
    %c0_13 = arith.constant 0 : index
    %28 = vector.load %arg5[%c0_12, %c0_13] : memref<1x512xf32, #tpu.memory_space<vmem>>, vector<1x512xf32>
    %29 = vector.broadcast %28 : vector<1x512xf32> to vector<16x512xf32>
    %30 = arith.addf %27, %29 : vector<16x512xf32>
    %cst_14 = arith.constant 5.000000e-01 : f32
    %31 = vector.broadcast %cst_14 : f32 to vector<16x512xf32>
    %32 = arith.mulf %31, %30 : vector<16x512xf32>
    %cst_15 = arith.constant 0.707106769 : f32
    %33 = vector.broadcast %cst_15 : f32 to vector<16x512xf32>
    %34 = arith.mulf %30, %33 : vector<16x512xf32>
    %35 = math.erf %34 : vector<16x512xf32>
    %cst_16 = arith.constant 1.000000e+00 : f32
    %36 = vector.broadcast %cst_16 : f32 to vector<16x512xf32>
    %37 = arith.addf %36, %35 : vector<16x512xf32>
    %38 = arith.mulf %32, %37 : vector<16x512xf32>
    %39 = arith.truncf %38 : vector<16x512xf32> to vector<16x512xbf16>
    %c0_17 = arith.constant 0 : index
    %c0_18 = arith.constant 0 : index
    %40 = vector.load %arg6[%c0_17, %c0_18] : memref<512x128xbf16, #tpu.memory_space<vmem>>, vector<512x128xbf16>
    %cst_19 = arith.constant dense<0.000000e+00> : vector<16x128xf32>
    %41 = tpu.matmul %39, %40, %cst_19 {dimension_numbers = #tpu.dot_dimension_numbers<[1], [0], [0], [1], [0, 0, 1, 1], [], []>} : vector<16x512xbf16>, vector<512x128xbf16>, vector<16x128xf32> -> vector<16x128xf32>
    %c0_20 = arith.constant 0 : index
    %c0_21 = arith.constant 0 : index
    %42 = vector.load %arg7[%c0_20, %c0_21] : memref<1x128xf32, #tpu.memory_space<vmem>>, vector<1x128xf32>
    %43 = vector.broadcast %42 : vector<1x128xf32> to vector<16x128xf32>
    %44 = arith.addf %41, %43 : vector<16x128xf32>
    %c0_22 = arith.constant 0 : index
    %c0_23 = arith.constant 0 : index
    %45 = vector.load %arg8[%c0_22, %c0_23] : memref<16x128xf32, #tpu.memory_space<vmem>>, vector<16x128xf32>
    tpu.vector_store %arg8[%c0_22, %c0_23], %44 {strides = array<i32>} : memref<16x128xf32, #tpu.memory_space<vmem>>, vector<16x128xf32>,
    return
  }
  func.func @transform_0(%arg0: i32) -> (i32, i32) {
    %c0_i32 = arith.constant 0 : i32
    %c0_i32_0 = arith.constant 0 : i32
    return %arg0, %c0_i32 : i32, i32
  }
  func.func @transform_1(%arg0: i32) -> (i32, i32) {
    %c0_i32 = arith.constant 0 : i32
    %c0_i32_0 = arith.constant 0 : i32
    %c0_i32_1 = arith.constant 0 : i32
    return %c0_i32, %c0_i32_0 : i32, i32
  }
  func.func @transform_2(%arg0: i32) -> (i32, i32) {
    %c0_i32 = arith.constant 0 : i32
    %c0_i32_0 = arith.constant 0 : i32
    %c0_i32_1 = arith.constant 0 : i32
    return %c0_i32, %c0_i32_0 : i32, i32
  }
  func.func @transform_3(%arg0: i32) -> (i32, i32) {
    %c0_i32 = arith.constant 0 : i32
    %c0_i32_0 = arith.constant 0 : i32
    %c0_i32_1 = arith.constant 0 : i32
    return %c0_i32, %c0_i32_0 : i32, i32
  }
  func.func @transform_4(%arg0: i32) -> (i32, i32) {
    %c0_i32 = arith.constant 0 : i32
    %c0_i32_0 = arith.constant 0 : i32
    %c0_i32_1 = arith.constant 0 : i32
    return %c0_i32, %c0_i32_0 : i32, i32
  }
  func.func @transform_5(%arg0: i32) -> (i32, i32) {
    %c0_i32 = arith.constant 0 : i32
    %c0_i32_0 = arith.constant 0 : i32
    %c0_i32_1 = arith.constant 0 : i32
    return %c0_i32, %c0_i32_0 : i32, i32
  }
  func.func @transform_6(%arg0: i32) -> (i32, i32) {
    %c0_i32 = arith.constant 0 : i32
    %c0_i32_0 = arith.constant 0 : i32
    %c0_i32_1 = arith.constant 0 : i32
    return %c0_i32, %c0_i32_0 : i32, i32
  }
  func.func @transform_7(%arg0: i32) -> (i32, i32) {
    %c0_i32 = arith.constant 0 : i32
    %c0_i32_0 = arith.constant 0 : i32
    return %arg0, %c0_i32 : i32, i32
  }
}

</mosaic_0001>

<llo_original>
// kernel: tpu_custom_call.1
$region0: #{tpu_custom_call.1}
  #allocation0 [shape = 'u32[]', space=smem, size = 0x4, offset = 0x4, fixed_abs, tag = 'smem constant byte address 0x4 - core index']
  #allocation1 [shape = 'u32[72,128]{1,0:T(1,128)}', space=vmem, size = 0x9000, scoped, tag = 'internal scratch']
  %s0 = inlined_call_operand.hbm [shape: f32[16,128], index: 0, kind: input, shape index: {}]
  %s1 = inlined_call_operand.hbm [shape: f32[1,128], index: 1, kind: input, shape index: {}]
  %s2 = inlined_call_operand.vmem [shape: f32[1,128], index: 2, kind: input, shape index: {}]
  %s3 = inlined_call_operand.hbm [shape: bf16[128,512], index: 3, kind: input, shape index: {}]
  %s4 = inlined_call_operand.hbm [shape: f32[1,512], index: 4, kind: input, shape index: {}]
  %s5 = inlined_call_operand.hbm [shape: bf16[512,128], index: 5, kind: input, shape index: {}]
  %s6 = inlined_call_operand.vmem [shape: f32[1,128], index: 6, kind: input, shape index: {}]
  %s7 = inlined_call_operand.hbm [shape: f32[16,128], index: 7, kind: output, shape index: {}]
  %s8 = sld [smem:[#allocation0]]
  $region58: #{tpu_custom_call.1} parent=0
    _
  %s10 = ssub.s32 1, %s8
  %s11 = scalar_select 0, %s10, %s8
  $region1: #{tpu_custom_call.1} parent=0
    #allocation2 [shape = 'u8[8192]{0}', space=vmem, size = 0x2000, scoped, tag = 'input window, operand 0, single buffered']
    #allocation3 [shape = 's32[1]{0}', space=sflag, size = 0x4, scoped, tag = 'scoped memory for tpu_custom_call.1']
    #allocation4 [shape = 's32[1]{0}', space=sflag, size = 0x4, scoped, tag = 'scoped memory for tpu_custom_call.1']
    #allocation5 [shape = 'u8[512]{0}', space=vmem, size = 0x400, scoped, tag = 'input window, operand 1, single buffered']
    #allocation6 [shape = 's32[1]{0}', space=sflag, size = 0x4, scoped, tag = 'scoped memory for tpu_custom_call.1']
    #allocation7 [shape = 'u8[131072]{0}', space=vmem, size = 0x20000, scoped, tag = 'input window, operand 3, single buffered']
    #allocation8 [shape = 'u8[2048]{0}', space=vmem, size = 0x800, scoped, tag = 'input window, operand 4, single buffered']
    #allocation9 [shape = 's32[1]{0}', space=sflag, size = 0x4, scoped, tag = 'scoped memory for tpu_custom_call.1']
    #allocation10 [shape = 'u8[131072]{0}', space=vmem, size = 0x20000, scoped, tag = 'input window, operand 5, single buffered']
    #allocation11 [shape = 'u8[8192]{0}', space=vmem, size = 0x2000, scoped, tag = 'output window, operand 0, single buffered']
    %12 = vsyncpa [#allocation3], 0
    %13 = vsyncpa [#allocation6], 0
    %14 = vsyncpa [#allocation9], 0
    %15 = vsyncpa [#allocation4], 0
    // Predicated region
    $region2: #{tpu_custom_call.1} parent=1 // pred_check
      _
    $region3: #{tpu_custom_call.1} parent=1 // pred_check_branch
      %17 = sbr.rel (0) target = $region5
    $region4: #{tpu_custom_call.1} parent=1 // pred_region
      %19 = vsyncadd [#allocation3], 0
      %s20 = sshll.u32 %s0, 4
      %s21 = int_to_ptr.hbm [resolvable:$true] %s20
      %s22 = sshll.u32 [#allocation2], 4
      %s23 = int_to_ptr.vmem [resolvable:$true] %s22
      %28 = dma.hbm_to_vmem [thread:$0]  %s21, 256, %s23, [#allocation3], 128, 128, 8
    $region5: #{tpu_custom_call.1} parent=1 // pred_fallthru
      _
    // Predicated region
    $region6: #{tpu_custom_call.1} parent=1 // pred_check
      _
    $region7: #{tpu_custom_call.1} parent=1 // pred_check_branch
      %30 = sbr.rel (0) target = $region9
    $region8: #{tpu_custom_call.1} parent=1 // pred_region
      %32 = vsyncadd [#allocation6], 0
      %s34 = sshll.u32 %s1, 4
      %s35 = int_to_ptr.hbm [resolvable:$true] %s34
      %s36 = sshll.u32 [#allocation5], 4
      %s37 = int_to_ptr.vmem [resolvable:$true] %s36
      %39 = dma.hbm_to_vmem [thread:$0]  %s35, 16, %s37, [#allocation6]
    $region9: #{tpu_custom_call.1} parent=1 // pred_fallthru
      _
    // Predicated region
    $region10: #{tpu_custom_call.1} parent=1 // pred_check
      _
    $region11: #{tpu_custom_call.1} parent=1 // pred_check_branch
      %41 = sbr.rel (0) target = $region13
    $region12: #{tpu_custom_call.1} parent=1 // pred_region
      _
    $region13: #{tpu_custom_call.1} parent=1 // pred_fallthru
      _
    // Predicated region
    $region14: #{tpu_custom_call.1} parent=1 // pred_check
      _
    $region15: #{tpu_custom_call.1} parent=1 // pred_check_branch
      %43 = sbr.rel (0) target = $region17
    $region16: #{tpu_custom_call.1} parent=1 // pred_region
      %45 = vsyncadd [#allocation6], 0
      %s46 = sshll.u32 %s3, 4
      %s47 = int_to_ptr.hbm [resolvable:$true] %s46
      %s48 = sshll.u32 [#allocation7], 4
      %s49 = int_to_ptr.vmem [resolvable:$true] %s48
      %54 = dma.hbm_to_vmem [thread:$0]  %s47, 4096, %s49, [#allocation6], 256, 256, 16
    $region17: #{tpu_custom_call.1} parent=1 // pred_fallthru
      _
    // Predicated region
    $region18: #{tpu_custom_call.1} parent=1 // pred_check
      _
    $region19: #{tpu_custom_call.1} parent=1 // pred_check_branch
      %56 = sbr.rel (0) target = $region21
    $region20: #{tpu_custom_call.1} parent=1 // pred_region
      %58 = vsyncadd [#allocation9], 0
      %s60 = sshll.u32 %s4, 4
      %s61 = int_to_ptr.hbm [resolvable:$true] %s60
      %s62 = sshll.u32 [#allocation8], 4
      %s63 = int_to_ptr.vmem [resolvable:$true] %s62
      %65 = dma.hbm_to_vmem [thread:$0]  %s61, 64, %s63, [#allocation9]
    $region21: #{tpu_custom_call.1} parent=1 // pred_fallthru
      _
    // Predicated region
    $region22: #{tpu_custom_call.1} parent=1 // pred_check
      _
    $region23: #{tpu_custom_call.1} parent=1 // pred_check_branch
      %67 = sbr.rel (0) target = $region25
    $region24: #{tpu_custom_call.1} parent=1 // pred_region
      %69 = vsyncadd [#allocation9], 0
      %s70 = sshll.u32 %s5, 4
      %s71 = int_to_ptr.hbm [resolvable:$true] %s70
      %s72 = sshll.u32 [#allocation10], 4
      %s73 = int_to_ptr.vmem [resolvable:$true] %s72
      %78 = dma.hbm_to_vmem [thread:$0]  %s71, 4096, %s73, [#allocation9], 64, 64, 4
    $region25: #{tpu_custom_call.1} parent=1 // pred_fallthru
      _
    // Predicated region
    $region26: #{tpu_custom_call.1} parent=1 // pred_check
      _
    $region27: #{tpu_custom_call.1} parent=1 // pred_check_branch
      %80 = sbr.rel (0) target = $region29
    $region28: #{tpu_custom_call.1} parent=1 // pred_region
      _
    $region29: #{tpu_custom_call.1} parent=1 // pred_fallthru
      _
    // Predicated region
    $region30: #{tpu_custom_call.1} parent=1 // pred_check
      _
    $region31: #{tpu_custom_call.1} parent=1 // pred_check_branch
      %82 = sbr.rel (0) target = $region33
    $region32: #{tpu_custom_call.1} parent=1 // pred_region
      %84 = dma.done [#allocation3], 256
    $region33: #{tpu_custom_call.1} parent=1 // pred_fallthru
      _
    // Predicated region
    $region34: #{tpu_custom_call.1} parent=1 // pred_check
      _
    $region35: #{tpu_custom_call.1} parent=1 // pred_check_branch
      %86 = sbr.rel (0) target = $region37
    $region36: #{tpu_custom_call.1} parent=1 // pred_region
      %88 = dma.done [#allocation6], 16
    $region37: #{tpu_custom_call.1} parent=1 // pred_fallthru
      _
    // Predicated region
    $region38: #{tpu_custom_call.1} parent=1 // pred_check
      _
    $region39: #{tpu_custom_call.1} parent=1 // pred_check_branch
      %90 = sbr.rel (0) target = $region41
    $region40: #{tpu_custom_call.1} parent=1 // pred_region
      %92 = dma.done [#allocation6], 4096
    $region41: #{tpu_custom_call.1} parent=1 // pred_fallthru
      _
    // Predicated region
    $region42: #{tpu_custom_call.1} parent=1 // pred_check
      _
    $region43: #{tpu_custom_call.1} parent=1 // pred_check_branch
      %94 = sbr.rel (0) target = $region45
    $region44: #{tpu_custom_call.1} parent=1 // pred_region
      %96 = dma.done [#allocation9], 64
    $region45: #{tpu_custom_call.1} parent=1 // pred_fallthru
      _
    // Predicated region
    $region46: #{tpu_custom_call.1} parent=1 // pred_check
      _
    $region47: #{tpu_custom_call.1} parent=1 // pred_check_branch
      %98 = sbr.rel (0) target = $region49
    $region48: #{tpu_custom_call.1} parent=1 // pred_region
      %100 = dma.done [#allocation9], 4096
    $region49: #{tpu_custom_call.1} parent=1 // pred_fallthru
      _
    %v101 = vld [vmem:[#allocation2] sm:$0xff]
    %v102 = vld [vmem:[#allocation2 + $0x8] sm:$0xff]
    %103 = vadd.xlane.f32.xlu0 %v101
    %v104 = vpop.xlane.xlu0 %103
    %105 = vadd.xlane.f32.xlu0 %v102
    %v106 = vpop.xlane.xlu0 %105
    %v107 = vrcp.pop 128.0
    %v108 = vmul.f32 128.0, %v107
    %v109 = vsub.f32 1.0, %v108
    %v110 = vmul.f32 %v107, %v109
    %v111 = vadd.f32 %v107, %v110
    %vm112 = vweird.f32 %v107
    %v113 = vsel %vm112, %v107, %v111
    %v114 = vmul.f32 %v104, %v113
    %v115 = vmul.f32 %v106, %v113
    %v116 = vsub.f32 %v101, %v114
    %v117 = vsub.f32 %v102, %v115
    %v118 = vmul.f32 %v116, %v116
    %v119 = vmul.f32 %v117, %v117
    %120 = vadd.xlane.f32.xlu0 %v118
    %v121 = vpop.xlane.xlu0 %120
    %122 = vadd.xlane.f32.xlu0 %v119
    %v123 = vpop.xlane.xlu0 %122
    %v124 = vmul.f32 %v121, %v113
    %v125 = vmul.f32 %v123, %v113
    %v126 = vadd.f32 %v124, 1e-05
    %v127 = vadd.f32 %v125, 1e-05
    %v128 = vrsqrt.pop %v126
    %v129 = vmul.f32 %v128, %v126
    %v130 = vmul.f32 %v129, %v128
    %v131 = vmul.f32 0.5, %v130
    %v132 = vsub.f32 1.5, %v131
    %v133 = vmul.f32 %v128, %v132
    %vm134 = vweird.f32 %v126
    %vm135 = vweird.f32 %v128
    %vm136 = vmor %vm134, %vm135
    %v137 = vsel %vm136, %v128, %v133
    %v138 = vrsqrt.pop %v127
    %v139 = vmul.f32 %v138, %v127
    %v140 = vmul.f32 %v139, %v138
    %v141 = vmul.f32 0.5, %v140
    %v142 = vsub.f32 1.5, %v141
    %v143 = vmul.f32 %v138, %v142
    %vm144 = vweird.f32 %v127
    %vm145 = vweird.f32 %v138
    %vm146 = vmor %vm144, %vm145
    %v147 = vsel %vm146, %v138, %v143
    %v148 = vmul.f32 %v116, %v137
    %v149 = vmul.f32 %v117, %v147
    %v150 = vld [vmem:[#allocation5] sm:$0x1]
    %v152 = vperm.slane %v150, 0
    %v154 = vmul.f32 %v148, %v152
    %v155 = vmul.f32 %v149, %v152
    %v156 = vld [vmem:[%s2] sm:$0x1]
    %v158 = vperm.slane %v156, 0
    %v160 = vadd.f32 %v154, %v158
    %v161 = vadd.f32 %v155, %v158
    %v162 = vpack.c.bf16 %v161, %v160
    %v163 = vld [vmem:[#allocation7] sm:$0xff]
    %v164 = vld [vmem:[#allocation7 + $0x8] sm:$0xff]
    %v165 = vld [vmem:[#allocation7 + $0x10] sm:$0xff]
    %v166 = vld [vmem:[#allocation7 + $0x18] sm:$0xff]
    %v167 = vld [vmem:[#allocation7 + $0x20] sm:$0xff]
    %v168 = vld [vmem:[#allocation7 + $0x28] sm:$0xff]
    %v169 = vld [vmem:[#allocation7 + $0x30] sm:$0xff]
    %v170 = vld [vmem:[#allocation7 + $0x38] sm:$0xff]
    %v171 = vld [vmem:[#allocation7 + $0x40] sm:$0xff]
    %v172 = vld [vmem:[#allocation7 + $0x48] sm:$0xff]
    %v173 = vld [vmem:[#allocation7 + $0x50] sm:$0xff]
    %v174 = vld [vmem:[#allocation7 + $0x58] sm:$0xff]
    %v175 = vld [vmem:[#allocation7 + $0x60] sm:$0xff]
    %v176 = vld [vmem:[#allocation7 + $0x68] sm:$0xff]
    %v177 = vld [vmem:[#allocation7 + $0x70] sm:$0xff]
    %v178 = vld [vmem:[#allocation7 + $0x78] sm:$0xff]
    %v179 = vld [vmem:[#allocation7 + $0x80] sm:$0xff]
    %v180 = vld [vmem:[#allocation7 + $0x88] sm:$0xff]
    %v181 = vld [vmem:[#allocation7 + $0x90] sm:$0xff]
    %v182 = vld [vmem:[#allocation7 + $0x98] sm:$0xff]
    %v183 = vld [vmem:[#allocation7 + $0xa0] sm:$0xff]
    %v184 = vld [vmem:[#allocation7 + $0xa8] sm:$0xff]
    %v185 = vld [vmem:[#allocation7 + $0xb0] sm:$0xff]
    %v186 = vld [vmem:[#allocation7 + $0xb8] sm:$0xff]
    %v187 = vld [vmem:[#allocation7 + $0xc0] sm:$0xff]
    %v188 = vld [vmem:[#allocation7 + $0xc8] sm:$0xff]
    %v189 = vld [vmem:[#allocation7 + $0xd0] sm:$0xff]
    %v190 = vld [vmem:[#allocation7 + $0xd8] sm:$0xff]
    %v191 = vld [vmem:[#allocation7 + $0xe0] sm:$0xff]
    %v192 = vld [vmem:[#allocation7 + $0xe8] sm:$0xff]
    %v193 = vld [vmem:[#allocation7 + $0xf0] sm:$0xff]
    %v194 = vld [vmem:[#allocation7 + $0xf8] sm:$0xff]
    %v195 = vld [vmem:[#allocation8] sm:$0xf]
    %v197 = vperm.slane %v195, 0
    %v198 = vperm.slane %v195, 1
    %v199 = vperm.slane %v195, 2
    %v200 = vperm.slane %v195, 3
    %v237 = vunpack.c.l.b16 %v163
    %v238 = vunpack.c.h.b16 %v163
    %v239 = vunpack.c.l.b16 %v164
    %v240 = vunpack.c.h.b16 %v164
    %v241 = vunpack.c.l.b16 %v165
    %v242 = vunpack.c.h.b16 %v165
    %v243 = vunpack.c.l.b16 %v166
    %v244 = vunpack.c.h.b16 %v166
    %v245 = vunpack.c.l.b16 %v167
    %v246 = vunpack.c.h.b16 %v167
    %v247 = vunpack.c.l.b16 %v168
    %v248 = vunpack.c.h.b16 %v168
    %v249 = vunpack.c.l.b16 %v169
    %v250 = vunpack.c.h.b16 %v169
    %v251 = vunpack.c.l.b16 %v170
    %v252 = vunpack.c.h.b16 %v170
    %v253 = vunpack.c.l.b16 %v171
    %v254 = vunpack.c.h.b16 %v171
    %v255 = vunpack.c.l.b16 %v172
    %v256 = vunpack.c.h.b16 %v172
    %v257 = vunpack.c.l.b16 %v173
    %v258 = vunpack.c.h.b16 %v173
    %v259 = vunpack.c.l.b16 %v174
    %v260 = vunpack.c.h.b16 %v174
    %v261 = vunpack.c.l.b16 %v175
    %v262 = vunpack.c.h.b16 %v175
    %v263 = vunpack.c.l.b16 %v176
    %v264 = vunpack.c.h.b16 %v176
    %v265 = vunpack.c.l.b16 %v177
    %v266 = vunpack.c.h.b16 %v177
    %v267 = vunpack.c.l.b16 %v178
    %v268 = vunpack.c.h.b16 %v178
    %v269 = vunpack.c.l.b16 %v179
    %v270 = vunpack.c.h.b16 %v179
    %v271 = vunpack.c.l.b16 %v180
    %v272 = vunpack.c.h.b16 %v180
    %v273 = vunpack.c.l.b16 %v181
    %v274 = vunpack.c.h.b16 %v181
    %v275 = vunpack.c.l.b16 %v182
    %v276 = vunpack.c.h.b16 %v182
    %v277 = vunpack.c.l.b16 %v183
    %v278 = vunpack.c.h.b16 %v183
    %v279 = vunpack.c.l.b16 %v184
    %v280 = vunpack.c.h.b16 %v184
    %v281 = vunpack.c.l.b16 %v185
    %v282 = vunpack.c.h.b16 %v185
    %v283 = vunpack.c.l.b16 %v186
    %v284 = vunpack.c.h.b16 %v186
    %v285 = vunpack.c.l.b16 %v187
    %v286 = vunpack.c.h.b16 %v187
    %v287 = vunpack.c.l.b16 %v188
    %v288 = vunpack.c.h.b16 %v188
    %v289 = vunpack.c.l.b16 %v189
    %v290 = vunpack.c.h.b16 %v189
    %v291 = vunpack.c.l.b16 %v190
    %v292 = vunpack.c.h.b16 %v190
    %v293 = vunpack.c.l.b16 %v191
    %v294 = vunpack.c.h.b16 %v191
    %v295 = vunpack.c.l.b16 %v192
    %v296 = vunpack.c.h.b16 %v192
    %v297 = vunpack.c.l.b16 %v193
    %v298 = vunpack.c.h.b16 %v193
    %v299 = vunpack.c.l.b16 %v194
    %v300 = vunpack.c.h.b16 %v194
    %v301 = vpack.c.b16 %v241, %v237
    %v302 = vpack.c.b16 %v242, %v238
    %v303 = vpack.c.b16 %v243, %v239
    %v304 = vpack.c.b16 %v244, %v240
    %v305 = vpack.c.b16 %v249, %v245
    %v306 = vpack.c.b16 %v250, %v246
    %v307 = vpack.c.b16 %v251, %v247
    %v308 = vpack.c.b16 %v252, %v248
    %v309 = vpack.c.b16 %v257, %v253
    %v310 = vpack.c.b16 %v258, %v254
    %v311 = vpack.c.b16 %v259, %v255
    %v312 = vpack.c.b16 %v260, %v256
    %v313 = vpack.c.b16 %v265, %v261
    %v314 = vpack.c.b16 %v266, %v262
    %v315 = vpack.c.b16 %v267, %v263
    %v316 = vpack.c.b16 %v268, %v264
    %v317 = vpack.c.b16 %v273, %v269
    %v318 = vpack.c.b16 %v274, %v270
    %v319 = vpack.c.b16 %v275, %v271
    %v320 = vpack.c.b16 %v276, %v272
    %v321 = vpack.c.b16 %v281, %v277
    %v322 = vpack.c.b16 %v282, %v278
    %v323 = vpack.c.b16 %v283, %v279
    %v324 = vpack.c.b16 %v284, %v280
    %v325 = vpack.c.b16 %v289, %v285
    %v326 = vpack.c.b16 %v290, %v286
    %v327 = vpack.c.b16 %v291, %v287
    %v328 = vpack.c.b16 %v292, %v288
    %v329 = vpack.c.b16 %v297, %v293
    %v330 = vpack.c.b16 %v298, %v294
    %v331 = vpack.c.b16 %v299, %v295
    %v332 = vpack.c.b16 %v300, %v296
    %365 = vmatpush.bf16.msra.mxu0 %v329
    %366 = vmatpush.bf16.msra.mxu0 %v325
    %367 = vmatpush.bf16.msra.mxu0 %v321
    %368 = vmatpush.bf16.msra.mxu0 %v317
    %369 = vmatpush.bf16.msra.mxu0 %v313
    %370 = vmatpush.bf16.msra.mxu0 %v309
    %371 = vmatpush.bf16.msra.mxu0 %v305
    %372 = vmatpush.bf16.msra.mxu0 %v301
    %373 = vmatmul.bf16.gmra.mxu0 %v162
    %v374 = vpop.f32.mrf.mxu0
    %v375 = vadd.f32 %v197, %v374
    %v376 = vpop.f32.mrf.mxu0
    %v377 = vadd.f32 %v197, %v376
    %378 = vdwg.mxu0
    %379 = vmatpush.bf16.msra.mxu0 %v330
    %380 = vmatpush.bf16.msra.mxu0 %v326
    %381 = vmatpush.bf16.msra.mxu0 %v322
    %382 = vmatpush.bf16.msra.mxu0 %v318
    %383 = vmatpush.bf16.msra.mxu0 %v314
    %384 = vmatpush.bf16.msra.mxu0 %v310
    %385 = vmatpush.bf16.msra.mxu0 %v306
    %386 = vmatpush.bf16.msra.mxu0 %v302
    %387 = vmatmul.bf16.gmra.mxu0 %v162
    %v388 = vpop.f32.mrf.mxu0
    %v389 = vadd.f32 %v198, %v388
    %v390 = vpop.f32.mrf.mxu0
    %v391 = vadd.f32 %v198, %v390
    %392 = vdwg.mxu0
    %393 = vmatpush.bf16.msra.mxu0 %v331
    %394 = vmatpush.bf16.msra.mxu0 %v327
    %395 = vmatpush.bf16.msra.mxu0 %v323
    %396 = vmatpush.bf16.msra.mxu0 %v319
    %397 = vmatpush.bf16.msra.mxu0 %v315
    %398 = vmatpush.bf16.msra.mxu0 %v311
    %399 = vmatpush.bf16.msra.mxu0 %v307
    %400 = vmatpush.bf16.msra.mxu0 %v303
    %401 = vmatmul.bf16.gmra.mxu0 %v162
    %v402 = vpop.f32.mrf.mxu0
    %v403 = vadd.f32 %v199, %v402
    %v404 = vpop.f32.mrf.mxu0
    %v405 = vadd.f32 %v199, %v404
    %406 = vdwg.mxu0
    %407 = vmatpush.bf16.msra.mxu0 %v332
    %408 = vmatpush.bf16.msra.mxu0 %v328
    %409 = vmatpush.bf16.msra.mxu0 %v324
    %410 = vmatpush.bf16.msra.mxu0 %v320
    %411 = vmatpush.bf16.msra.mxu0 %v316
    %412 = vmatpush.bf16.msra.mxu0 %v312
    %413 = vmatpush.bf16.msra.mxu0 %v308
    %414 = vmatpush.bf16.msra.mxu0 %v304
    %415 = vmatmul.bf16.gmra.mxu0 %v162
    %v416 = vpop.f32.mrf.mxu0
    %v417 = vadd.f32 %v200, %v416
    %v418 = vpop.f32.mrf.mxu0
    %v419 = vadd.f32 %v200, %v418
    %420 = vdwg.mxu0
    %v421 = vmul.f32 %v375, 0.5
    %v422 = vmul.f32 %v389, 0.5
    %v423 = vmul.f32 %v403, 0.5
    %v424 = vmul.f32 %v417, 0.5
    %v425 = vmul.f32 %v377, 0.5
    %v426 = vmul.f32 %v391, 0.5
    %v427 = vmul.f32 %v405, 0.5
    %v428 = vmul.f32 %v419, 0.5
    %v429 = vmul.f32 %v375, 0.70710677
    %v430 = vmul.f32 %v389, 0.70710677
    %v431 = vmul.f32 %v403, 0.70710677
    %v432 = vmul.f32 %v417, 0.70710677
    %v433 = vmul.f32 %v377, 0.70710677
    %v434 = vmul.f32 %v391, 0.70710677
    %v435 = vmul.f32 %v405, 0.70710677
    %v436 = vmul.f32 %v419, 0.70710677
    %v437 = vmul.f32 %v429, %v429
    %v438 = vmin.f32 16.0, %v437
    %v439 = vmul.f32 %v438, 2.1237322e-06
    %v440 = vadd.f32 %v439, 0.00028619796
    %v441 = vmul.f32 %v438, %v440
    %v442 = vadd.f32 %v441, 0.0036580483
    %v443 = vmul.f32 %v438, %v442
    %v444 = vadd.f32 %v443, 0.05243302
    %v445 = vmul.f32 %v438, %v444
    %v446 = vadd.f32 %v445, 0.18741608
    %v447 = vmul.f32 %v438, %v446
    %v448 = vadd.f32 %v447, 1.1283791
    %v449 = vmul.f32 %v429, %v448
    %v450 = vmul.f32 %v438, 3.8918573e-05
    %v451 = vadd.f32 %v450, 0.001143296
    %v452 = vmul.f32 %v438, %v451
    %v453 = vadd.f32 %v452, 0.014752088
    %v454 = vmul.f32 %v438, %v453
    %v455 = vadd.f32 %v454, 0.112945676
    %v456 = vmul.f32 %v438, %v455
    %v457 = vadd.f32 %v456, 0.4994258
    %v458 = vmul.f32 %v438, %v457
    %v459 = vadd.f32 %v458, 1.0
    %v460 = vrcp.pop %v459
    %v461 = vmul.f32 %v459, %v460
    %v462 = vsub.f32 1.0, %v461
    %v463 = vmul.f32 %v460, %v462
    %v464 = vadd.f32 %v460, %v463
    %vm465 = vweird.f32 %v459
    %vm466 = vweird.f32 %v460
    %vm467 = vmor %vm465, %vm466
    %v468 = vsel %vm467, %v460, %v464
    %v469 = vand.u32 2147483647, %v459
    %vm470 = vcmp.eq.f32.partialorder %v469, 8.507059e+37
    %v471 = vand.u32 %v459, 2147483648
    %v472 = vor.u32 1.1754944e-38, %v471
    %v473 = vsel %vm470, %v472, %v468
    %v474 = vmul.f32 %v449, %v473
    %v475 = vmin.f32 %v474, 1.0
    %v476 = vmax.f32 %v475, -1.0
    %v477 = vmul.f32 %v430, %v430
    %v478 = vmin.f32 16.0, %v477
    %v479 = vmul.f32 %v478, 2.1237322e-06
    %v480 = vadd.f32 %v479, 0.00028619796
    %v481 = vmul.f32 %v478, %v480
    %v482 = vadd.f32 %v481, 0.0036580483
    %v483 = vmul.f32 %v478, %v482
    %v484 = vadd.f32 %v483, 0.05243302
    %v485 = vmul.f32 %v478, %v484
    %v486 = vadd.f32 %v485, 0.18741608
    %v487 = vmul.f32 %v478, %v486
    %v488 = vadd.f32 %v487, 1.1283791
    %v489 = vmul.f32 %v430, %v488
    %v490 = vmul.f32 %v478, 3.8918573e-05
    %v491 = vadd.f32 %v490, 0.001143296
    %v492 = vmul.f32 %v478, %v491
    %v493 = vadd.f32 %v492, 0.014752088
    %v494 = vmul.f32 %v478, %v493
    %v495 = vadd.f32 %v494, 0.112945676
    %v496 = vmul.f32 %v478, %v495
    %v497 = vadd.f32 %v496, 0.4994258
    %v498 = vmul.f32 %v478, %v497
    %v499 = vadd.f32 %v498, 1.0
    %v500 = vrcp.pop %v499
    %v501 = vmul.f32 %v499, %v500
    %v502 = vsub.f32 1.0, %v501
    %v503 = vmul.f32 %v500, %v502
    %v504 = vadd.f32 %v500, %v503
    %vm505 = vweird.f32 %v499
    %vm506 = vweird.f32 %v500
    %vm507 = vmor %vm505, %vm506
    %v508 = vsel %vm507, %v500, %v504
    %v509 = vand.u32 2147483647, %v499
    %vm510 = vcmp.eq.f32.partialorder %v509, 8.507059e+37
    %v511 = vand.u32 %v499, 2147483648
    %v512 = vor.u32 1.1754944e-38, %v511
    %v513 = vsel %vm510, %v512, %v508
    %v514 = vmul.f32 %v489, %v513
    %v515 = vmin.f32 %v514, 1.0
    %v516 = vmax.f32 %v515, -1.0
    %v517 = vmul.f32 %v431, %v431
    %v518 = vmin.f32 16.0, %v517
    %v519 = vmul.f32 %v518, 2.1237322e-06
    %v520 = vadd.f32 %v519, 0.00028619796
    %v521 = vmul.f32 %v518, %v520
    %v522 = vadd.f32 %v521, 0.0036580483
    %v523 = vmul.f32 %v518, %v522
    %v524 = vadd.f32 %v523, 0.05243302
    %v525 = vmul.f32 %v518, %v524
    %v526 = vadd.f32 %v525, 0.18741608
    %v527 = vmul.f32 %v518, %v526
    %v528 = vadd.f32 %v527, 1.1283791
    %v529 = vmul.f32 %v431, %v528
    %v530 = vmul.f32 %v518, 3.8918573e-05
    %v531 = vadd.f32 %v530, 0.001143296
    %v532 = vmul.f32 %v518, %v531
    %v533 = vadd.f32 %v532, 0.014752088
    %v534 = vmul.f32 %v518, %v533
    %v535 = vadd.f32 %v534, 0.112945676
    %v536 = vmul.f32 %v518, %v535
    %v537 = vadd.f32 %v536, 0.4994258
    %v538 = vmul.f32 %v518, %v537
    %v539 = vadd.f32 %v538, 1.0
    %v540 = vrcp.pop %v539
    %v541 = vmul.f32 %v539, %v540
    %v542 = vsub.f32 1.0, %v541
    %v543 = vmul.f32 %v540, %v542
    %v544 = vadd.f32 %v540, %v543
    %vm545 = vweird.f32 %v539
    %vm546 = vweird.f32 %v540
    %vm547 = vmor %vm545, %vm546
    %v548 = vsel %vm547, %v540, %v544
    %v549 = vand.u32 2147483647, %v539
    %vm550 = vcmp.eq.f32.partialorder %v549, 8.507059e+37
    %v551 = vand.u32 %v539, 2147483648
    %v552 = vor.u32 1.1754944e-38, %v551
    %v553 = vsel %vm550, %v552, %v548
    %v554 = vmul.f32 %v529, %v553
    %v555 = vmin.f32 %v554, 1.0
    %v556 = vmax.f32 %v555, -1.0
    %v557 = vmul.f32 %v432, %v432
    %v558 = vmin.f32 16.0, %v557
    %v559 = vmul.f32 %v558, 2.1237322e-06
    %v560 = vadd.f32 %v559, 0.00028619796
    %v561 = vmul.f32 %v558, %v560
    %v562 = vadd.f32 %v561, 0.0036580483
    %v563 = vmul.f32 %v558, %v562
    %v564 = vadd.f32 %v563, 0.05243302
    %v565 = vmul.f32 %v558, %v564
    %v566 = vadd.f32 %v565, 0.18741608
    %v567 = vmul.f32 %v558, %v566
    %v568 = vadd.f32 %v567, 1.1283791
    %v569 = vmul.f32 %v432, %v568
    %v570 = vmul.f32 %v558, 3.8918573e-05
    %v571 = vadd.f32 %v570, 0.001143296
    %v572 = vmul.f32 %v558, %v571
    %v573 = vadd.f32 %v572, 0.014752088
    %v574 = vmul.f32 %v558, %v573
    %v575 = vadd.f32 %v574, 0.112945676
    %v576 = vmul.f32 %v558, %v575
    %v577 = vadd.f32 %v576, 0.4994258
    %v578 = vmul.f32 %v558, %v577
    %v579 = vadd.f32 %v578, 1.0
    %v580 = vrcp.pop %v579
    %v581 = vmul.f32 %v579, %v580
    %v582 = vsub.f32 1.0, %v581
    %v583 = vmul.f32 %v580, %v582
    %v584 = vadd.f32 %v580, %v583
    %vm585 = vweird.f32 %v579
    %vm586 = vweird.f32 %v580
    %vm587 = vmor %vm585, %vm586
    %v588 = vsel %vm587, %v580, %v584
    %v589 = vand.u32 2147483647, %v579
    %vm590 = vcmp.eq.f32.partialorder %v589, 8.507059e+37
    %v591 = vand.u32 %v579, 2147483648
    %v592 = vor.u32 1.1754944e-38, %v591
    %v593 = vsel %vm590, %v592, %v588
    %v594 = vmul.f32 %v569, %v593
    %v595 = vmin.f32 %v594, 1.0
    %v596 = vmax.f32 %v595, -1.0
    %v597 = vmul.f32 %v433, %v433
    %v598 = vmin.f32 16.0, %v597
    %v599 = vmul.f32 %v598, 2.1237322e-06
    %v600 = vadd.f32 %v599, 0.00028619796
    %v601 = vmul.f32 %v598, %v600
    %v602 = vadd.f32 %v601, 0.0036580483
    %v603 = vmul.f32 %v598, %v602
    %v604 = vadd.f32 %v603, 0.05243302
    %v605 = vmul.f32 %v598, %v604
    %v606 = vadd.f32 %v605, 0.18741608
    %v607 = vmul.f32 %v598, %v606
    %v608 = vadd.f32 %v607, 1.1283791
    %v609 = vmul.f32 %v433, %v608
    %v610 = vmul.f32 %v598, 3.8918573e-05
    %v611 = vadd.f32 %v610, 0.001143296
    %v612 = vmul.f32 %v598, %v611
    %v613 = vadd.f32 %v612, 0.014752088
    %v614 = vmul.f32 %v598, %v613
    %v615 = vadd.f32 %v614, 0.112945676
    %v616 = vmul.f32 %v598, %v615
    %v617 = vadd.f32 %v616, 0.4994258
    %v618 = vmul.f32 %v598, %v617
    %v619 = vadd.f32 %v618, 1.0
    %v620 = vrcp.pop %v619
    %v621 = vmul.f32 %v619, %v620
    %v622 = vsub.f32 1.0, %v621
    %v623 = vmul.f32 %v620, %v622
    %v624 = vadd.f32 %v620, %v623
    %vm625 = vweird.f32 %v619
    %vm626 = vweird.f32 %v620
    %vm627 = vmor %vm625, %vm626
    %v628 = vsel %vm627, %v620, %v624
    %v629 = vand.u32 2147483647, %v619
    %vm630 = vcmp.eq.f32.partialorder %v629, 8.507059e+37
    %v631 = vand.u32 %v619, 2147483648
    %v632 = vor.u32 1.1754944e-38, %v631
    %v633 = vsel %vm630, %v632, %v628
    %v634 = vmul.f32 %v609, %v633
    %v635 = vmin.f32 %v634, 1.0
    %v636 = vmax.f32 %v635, -1.0
    %v637 = vmul.f32 %v434, %v434
    %v638 = vmin.f32 16.0, %v637
    %v639 = vmul.f32 %v638, 2.1237322e-06
    %v640 = vadd.f32 %v639, 0.00028619796
    %v641 = vmul.f32 %v638, %v640
    %v642 = vadd.f32 %v641, 0.0036580483
    %v643 = vmul.f32 %v638, %v642
    %v644 = vadd.f32 %v643, 0.05243302
    %v645 = vmul.f32 %v638, %v644
    %v646 = vadd.f32 %v645, 0.18741608
    %v647 = vmul.f32 %v638, %v646
    %v648 = vadd.f32 %v647, 1.1283791
    %v649 = vmul.f32 %v434, %v648
    %v650 = vmul.f32 %v638, 3.8918573e-05
    %v651 = vadd.f32 %v650, 0.001143296
    %v652 = vmul.f32 %v638, %v651
    %v653 = vadd.f32 %v652, 0.014752088
    %v654 = vmul.f32 %v638, %v653
    %v655 = vadd.f32 %v654, 0.112945676
    %v656 = vmul.f32 %v638, %v655
    %v657 = vadd.f32 %v656, 0.4994258
    %v658 = vmul.f32 %v638, %v657
    %v659 = vadd.f32 %v658, 1.0
    %v660 = vrcp.pop %v659
    %v661 = vmul.f32 %v659, %v660
    %v662 = vsub.f32 1.0, %v661
    %v663 = vmul.f32 %v660, %v662
    %v664 = vadd.f32 %v660, %v663
    %vm665 = vweird.f32 %v659
    %vm666 = vweird.f32 %v660
    %vm667 = vmor %vm665, %vm666
    %v668 = vsel %vm667, %v660, %v664
    %v669 = vand.u32 2147483647, %v659
    %vm670 = vcmp.eq.f32.partialorder %v669, 8.507059e+37
    %v671 = vand.u32 %v659, 2147483648
    %v672 = vor.u32 1.1754944e-38, %v671
    %v673 = vsel %vm670, %v672, %v668
    %v674 = vmul.f32 %v649, %v673
    %v675 = vmin.f32 %v674, 1.0
    %v676 = vmax.f32 %v675, -1.0
    %v677 = vmul.f32 %v435, %v435
    %v678 = vmin.f32 16.0, %v677
    %v679 = vmul.f32 %v678, 2.1237322e-06
    %v680 = vadd.f32 %v679, 0.00028619796
    %v681 = vmul.f32 %v678, %v680
    %v682 = vadd.f32 %v681, 0.0036580483
    %v683 = vmul.f32 %v678, %v682
    %v684 = vadd.f32 %v683, 0.05243302
    %v685 = vmul.f32 %v678, %v684
    %v686 = vadd.f32 %v685, 0.18741608
    %v687 = vmul.f32 %v678, %v686
    %v688 = vadd.f32 %v687, 1.1283791
    %v689 = vmul.f32 %v435, %v688
    %v690 = vmul.f32 %v678, 3.8918573e-05
    %v691 = vadd.f32 %v690, 0.001143296
    %v692 = vmul.f32 %v678, %v691
    %v693 = vadd.f32 %v692, 0.014752088
    %v694 = vmul.f32 %v678, %v693
    %v695 = vadd.f32 %v694, 0.112945676
    %v696 = vmul.f32 %v678, %v695
    %v697 = vadd.f32 %v696, 0.4994258
    %v698 = vmul.f32 %v678, %v697
    %v699 = vadd.f32 %v698, 1.0
    %v700 = vrcp.pop %v699
    %v701 = vmul.f32 %v699, %v700
    %v702 = vsub.f32 1.0, %v701
    %v703 = vmul.f32 %v700, %v702
    %v704 = vadd.f32 %v700, %v703
    %vm705 = vweird.f32 %v699
    %vm706 = vweird.f32 %v700
    %vm707 = vmor %vm705, %vm706
    %v708 = vsel %vm707, %v700, %v704
    %v709 = vand.u32 2147483647, %v699
    %vm710 = vcmp.eq.f32.partialorder %v709, 8.507059e+37
    %v711 = vand.u32 %v699, 2147483648
    %v712 = vor.u32 1.1754944e-38, %v711
    %v713 = vsel %vm710, %v712, %v708
    %v714 = vmul.f32 %v689, %v713
    %v715 = vmin.f32 %v714, 1.0
    %v716 = vmax.f32 %v715, -1.0
    %v717 = vmul.f32 %v436, %v436
    %v718 = vmin.f32 16.0, %v717
    %v719 = vmul.f32 %v718, 2.1237322e-06
    %v720 = vadd.f32 %v719, 0.00028619796
    %v721 = vmul.f32 %v718, %v720
    %v722 = vadd.f32 %v721, 0.0036580483
    %v723 = vmul.f32 %v718, %v722
    %v724 = vadd.f32 %v723, 0.05243302
    %v725 = vmul.f32 %v718, %v724
    %v726 = vadd.f32 %v725, 0.18741608
    %v727 = vmul.f32 %v718, %v726
    %v728 = vadd.f32 %v727, 1.1283791
    %v729 = vmul.f32 %v436, %v728
    %v730 = vmul.f32 %v718, 3.8918573e-05
    %v731 = vadd.f32 %v730, 0.001143296
    %v732 = vmul.f32 %v718, %v731
    %v733 = vadd.f32 %v732, 0.014752088
    %v734 = vmul.f32 %v718, %v733
    %v735 = vadd.f32 %v734, 0.112945676
    %v736 = vmul.f32 %v718, %v735
    %v737 = vadd.f32 %v736, 0.4994258
    %v738 = vmul.f32 %v718, %v737
    %v739 = vadd.f32 %v738, 1.0
    %v740 = vrcp.pop %v739
    %v741 = vmul.f32 %v739, %v740
    %v742 = vsub.f32 1.0, %v741
    %v743 = vmul.f32 %v740, %v742
    %v744 = vadd.f32 %v740, %v743
    %vm745 = vweird.f32 %v739
    %vm746 = vweird.f32 %v740
    %vm747 = vmor %vm745, %vm746
    %v748 = vsel %vm747, %v740, %v744
    %v749 = vand.u32 2147483647, %v739
    %vm750 = vcmp.eq.f32.partialorder %v749, 8.507059e+37
    %v751 = vand.u32 %v739, 2147483648
    %v752 = vor.u32 1.1754944e-38, %v751
    %v753 = vsel %vm750, %v752, %v748
    %v754 = vmul.f32 %v729, %v753
    %v755 = vmin.f32 %v754, 1.0
    %v756 = vmax.f32 %v755, -1.0
    %v757 = vadd.f32 %v476, 1.0
    %v758 = vadd.f32 %v516, 1.0
    %v759 = vadd.f32 %v556, 1.0
    %v760 = vadd.f32 %v596, 1.0
    %v761 = vadd.f32 %v636, 1.0
    %v762 = vadd.f32 %v676, 1.0
    %v763 = vadd.f32 %v716, 1.0
    %v764 = vadd.f32 %v756, 1.0
    %v765 = vmul.f32 %v421, %v757
    %v766 = vmul.f32 %v422, %v758
    %v767 = vmul.f32 %v423, %v759
    %v768 = vmul.f32 %v424, %v760
    %v769 = vmul.f32 %v425, %v761
    %v770 = vmul.f32 %v426, %v762
    %v771 = vmul.f32 %v427, %v763
    %v772 = vmul.f32 %v428, %v764
    %v773 = vpack.c.bf16 %v769, %v765
    %v774 = vpack.c.bf16 %v770, %v766
    %v775 = vpack.c.bf16 %v771, %v767
    %v776 = vpack.c.bf16 %v772, %v768
    %v777 = vld [vmem:[#allocation10] sm:$0xf]
    %v778 = vld [vmem:[#allocation10 + $0x4] sm:$0xf]
    %v779 = vld [vmem:[#allocation10 + $0x8] sm:$0xf]
    %v780 = vld [vmem:[#allocation10 + $0xc] sm:$0xf]
    %v781 = vld [vmem:[#allocation10 + $0x10] sm:$0xf]
    %v782 = vld [vmem:[#allocation10 + $0x14] sm:$0xf]
    %v783 = vld [vmem:[#allocation10 + $0x18] sm:$0xf]
    %v784 = vld [vmem:[#allocation10 + $0x1c] sm:$0xf]
    %v785 = vld [vmem:[#allocation10 + $0x20] sm:$0xf]
    %v786 = vld [vmem:[#allocation10 + $0x24] sm:$0xf]
    %v787 = vld [vmem:[#allocation10 + $0x28] sm:$0xf]
    %v788 = vld [vmem:[#allocation10 + $0x2c] sm:$0xf]
    %v789 = vld [vmem:[#allocation10 + $0x30] sm:$0xf]
    %v790 = vld [vmem:[#allocation10 + $0x34] sm:$0xf]
    %v791 = vld [vmem:[#allocation10 + $0x38] sm:$0xf]
    %v792 = vld [vmem:[#allocation10 + $0x3c] sm:$0xf]
    %v793 = vld [vmem:[#allocation10 + $0x40] sm:$0xf]
    %v794 = vld [vmem:[#allocation10 + $0x44] sm:$0xf]
    %v795 = vld [vmem:[#allocation10 + $0x48] sm:$0xf]
    %v796 = vld [vmem:[#allocation10 + $0x4c] sm:$0xf]
    %v797 = vld [vmem:[#allocation10 + $0x50] sm:$0xf]
    %v798 = vld [vmem:[#allocation10 + $0x54] sm:$0xf]
    %v799 = vld [vmem:[#allocation10 + $0x58] sm:$0xf]
    %v800 = vld [vmem:[#allocation10 + $0x5c] sm:$0xf]
    %v801 = vld [vmem:[#allocation10 + $0x60] sm:$0xf]
    %v802 = vld [vmem:[#allocation10 + $0x64] sm:$0xf]
    %v803 = vld [vmem:[#allocation10 + $0x68] sm:$0xf]
    %v804 = vld [vmem:[#allocation10 + $0x6c] sm:$0xf]
    %v805 = vld [vmem:[#allocation10 + $0x70] sm:$0xf]
    %v806 = vld [vmem:[#allocation10 + $0x74] sm:$0xf]
    %v807 = vld [vmem:[#allocation10 + $0x78] sm:$0xf]
    %v808 = vld [vmem:[#allocation10 + $0x7c] sm:$0xf]
    %v809 = vld [vmem:[#allocation10 + $0x80] sm:$0xf]
    %v810 = vld [vmem:[#allocation10 + $0x84] sm:$0xf]
    %v811 = vld [vmem:[#allocation10 + $0x88] sm:$0xf]
    %v812 = vld [vmem:[#allocation10 + $0x8c] sm:$0xf]
    %v813 = vld [vmem:[#allocation10 + $0x90] sm:$0xf]
    %v814 = vld [vmem:[#allocation10 + $0x94] sm:$0xf]
    %v815 = vld [vmem:[#allocation10 + $0x98] sm:$0xf]
    %v816 = vld [vmem:[#allocation10 + $0x9c] sm:$0xf]
    %v817 = vld [vmem:[#allocation10 + $0xa0] sm:$0xf]
    %v818 = vld [vmem:[#allocation10 + $0xa4] sm:$0xf]
    %v819 = vld [vmem:[#allocation10 + $0xa8] sm:$0xf]
    %v820 = vld [vmem:[#allocation10 + $0xac] sm:$0xf]
    %v821 = vld [vmem:[#allocation10 + $0xb0] sm:$0xf]
    %v822 = vld [vmem:[#allocation10 + $0xb4] sm:$0xf]
    %v823 = vld [vmem:[#allocation10 + $0xb8] sm:$0xf]
    %v824 = vld [vmem:[#allocation10 + $0xbc] sm:$0xf]
    %v825 = vld [vmem:[#allocation10 + $0xc0] sm:$0xf]
    %v826 = vld [vmem:[#allocation10 + $0xc4] sm:$0xf]
    %v827 = vld [vmem:[#allocation10 + $0xc8] sm:$0xf]
    %v828 = vld [vmem:[#allocation10 + $0xcc] sm:$0xf]
    %v829 = vld [vmem:[#allocation10 + $0xd0] sm:$0xf]
    %v830 = vld [vmem:[#allocation10 + $0xd4] sm:$0xf]
    %v831 = vld [vmem:[#allocation10 + $0xd8] sm:$0xf]
    %v832 = vld [vmem:[#allocation10 + $0xdc] sm:$0xf]
    %v833 = vld [vmem:[#allocation10 + $0xe0] sm:$0xf]
    %v834 = vld [vmem:[#allocation10 + $0xe4] sm:$0xf]
    %v835 = vld [vmem:[#allocation10 + $0xe8] sm:$0xf]
    %v836 = vld [vmem:[#allocation10 + $0xec] sm:$0xf]
    %v837 = vld [vmem:[#allocation10 + $0xf0] sm:$0xf]
    %v838 = vld [vmem:[#allocation10 + $0xf4] sm:$0xf]
    %v839 = vld [vmem:[#allocation10 + $0xf8] sm:$0xf]
    %v840 = vld [vmem:[#allocation10 + $0xfc] sm:$0xf]
    %v841 = vld [vmem:[%s6] sm:$0x1]
    %v843 = vperm.slane %v841, 0
    %v909 = vunpack.c.l.b16 %v777
    %v910 = vunpack.c.l.b16 %v778
    %v911 = vunpack.c.l.b16 %v779
    %v912 = vunpack.c.l.b16 %v780
    %v913 = vunpack.c.l.b16 %v781
    %v914 = vunpack.c.l.b16 %v782
    %v915 = vunpack.c.l.b16 %v783
    %v916 = vunpack.c.l.b16 %v784
    %v917 = vunpack.c.l.b16 %v785
    %v918 = vunpack.c.l.b16 %v786
    %v919 = vunpack.c.l.b16 %v787
    %v920 = vunpack.c.l.b16 %v788
    %v921 = vunpack.c.l.b16 %v789
    %v922 = vunpack.c.l.b16 %v790
    %v923 = vunpack.c.l.b16 %v791
    %v924 = vunpack.c.l.b16 %v792
    %v925 = vunpack.c.l.b16 %v793
    %v926 = vunpack.c.l.b16 %v794
    %v927 = vunpack.c.l.b16 %v795
    %v928 = vunpack.c.l.b16 %v796
    %v929 = vunpack.c.l.b16 %v797
    %v930 = vunpack.c.l.b16 %v798
    %v931 = vunpack.c.l.b16 %v799
    %v932 = vunpack.c.l.b16 %v800
    %v933 = vunpack.c.l.b16 %v801
    %v934 = vunpack.c.l.b16 %v802
    %v935 = vunpack.c.l.b16 %v803
    %v936 = vunpack.c.l.b16 %v804
    %v937 = vunpack.c.l.b16 %v805
    %v938 = vunpack.c.l.b16 %v806
    %v939 = vunpack.c.l.b16 %v807
    %v940 = vunpack.c.l.b16 %v808
    %v941 = vunpack.c.l.b16 %v809
    %v942 = vunpack.c.l.b16 %v810
    %v943 = vunpack.c.l.b16 %v811
    %v944 = vunpack.c.l.b16 %v812
    %v945 = vunpack.c.l.b16 %v813
    %v946 = vunpack.c.l.b16 %v814
    %v947 = vunpack.c.l.b16 %v815
    %v948 = vunpack.c.l.b16 %v816
    %v949 = vunpack.c.l.b16 %v817
    %v950 = vunpack.c.l.b16 %v818
    %v951 = vunpack.c.l.b16 %v819
    %v952 = vunpack.c.l.b16 %v820
    %v953 = vunpack.c.l.b16 %v821
    %v954 = vunpack.c.l.b16 %v822
    %v955 = vunpack.c.l.b16 %v823
    %v956 = vunpack.c.l.b16 %v824
    %v957 = vunpack.c.l.b16 %v825
    %v958 = vunpack.c.l.b16 %v826
    %v959 = vunpack.c.l.b16 %v827
    %v960 = vunpack.c.l.b16 %v828
    %v961 = vunpack.c.l.b16 %v829
    %v962 = vunpack.c.l.b16 %v830
    %v963 = vunpack.c.l.b16 %v831
    %v964 = vunpack.c.l.b16 %v832
    %v965 = vunpack.c.l.b16 %v833
    %v966 = vunpack.c.l.b16 %v834
    %v967 = vunpack.c.l.b16 %v835
    %v968 = vunpack.c.l.b16 %v836
    %v969 = vunpack.c.l.b16 %v837
    %v970 = vunpack.c.l.b16 %v838
    %v971 = vunpack.c.l.b16 %v839
    %v972 = vunpack.c.l.b16 %v840
    %v973 = vpack.c.b16 %v910, %v909
    %v974 = vpack.c.b16 %v912, %v911
    %v975 = vpack.c.b16 %v914, %v913
    %v976 = vpack.c.b16 %v916, %v915
    %v977 = vpack.c.b16 %v918, %v917
    %v978 = vpack.c.b16 %v920, %v919
    %v979 = vpack.c.b16 %v922, %v921
    %v980 = vpack.c.b16 %v924, %v923
    %v981 = vpack.c.b16 %v926, %v925
    %v982 = vpack.c.b16 %v928, %v927
    %v983 = vpack.c.b16 %v930, %v929
    %v984 = vpack.c.b16 %v932, %v931
    %v985 = vpack.c.b16 %v934, %v933
    %v986 = vpack.c.b16 %v936, %v935
    %v987 = vpack.c.b16 %v938, %v937
    %v988 = vpack.c.b16 %v940, %v939
    %v989 = vpack.c.b16 %v942, %v941
    %v990 = vpack.c.b16 %v944, %v943
    %v991 = vpack.c.b16 %v946, %v945
    %v992 = vpack.c.b16 %v948, %v947
    %v993 = vpack.c.b16 %v950, %v949
    %v994 = vpack.c.b16 %v952, %v951
    %v995 = vpack.c.b16 %v954, %v953
    %v996 = vpack.c.b16 %v956, %v955
    %v997 = vpack.c.b16 %v958, %v957
    %v998 = vpack.c.b16 %v960, %v959
    %v999 = vpack.c.b16 %v962, %v961
    %v1000 = vpack.c.b16 %v964, %v963
    %v1001 = vpack.c.b16 %v966, %v965
    %v1002 = vpack.c.b16 %v968, %v967
    %v1003 = vpack.c.b16 %v970, %v969
    %v1004 = vpack.c.b16 %v972, %v971
    %1037 = vmatpush.bf16.msra.mxu0 %v980
    %1038 = vmatpush.bf16.msra.mxu0 %v979
    %1039 = vmatpush.bf16.msra.mxu0 %v978
    %1040 = vmatpush.bf16.msra.mxu0 %v977
    %1041 = vmatpush.bf16.msra.mxu0 %v976
    %1042 = vmatpush.bf16.msra.mxu0 %v975
    %1043 = vmatpush.bf16.msra.mxu0 %v974
    %1044 = vmatpush.bf16.msra.mxu0 %v973
    %1045 = vmatmul.bf16.gmra.mxu0 %v773
    %v1046 = vpop.f32.mrf.mxu0
    %v1047 = vadd.f32 %v843, %v1046
    %v1048 = vpop.f32.mrf.mxu0
    %v1049 = vadd.f32 %v843, %v1048
    %1050 = vdwg.mxu0
    %1051 = vmatpush.bf16.msra.mxu0 %v988
    %1052 = vmatpush.bf16.msra.mxu0 %v987
    %1053 = vmatpush.bf16.msra.mxu0 %v986
    %1054 = vmatpush.bf16.msra.mxu0 %v985
    %1055 = vmatpush.bf16.msra.mxu0 %v984
    %1056 = vmatpush.bf16.msra.mxu0 %v983
    %1057 = vmatpush.bf16.msra.mxu0 %v982
    %1058 = vmatpush.bf16.msra.mxu0 %v981
    %1059 = vmatmul.bf16.gmra.mxu0 %v774
    %v1060 = vpop.f32.mrf.mxu0
    %v1061 = vadd.f32 %v1047, %v1060
    %v1062 = vpop.f32.mrf.mxu0
    %v1063 = vadd.f32 %v1049, %v1062
    %1064 = vdwg.mxu0
    %1065 = vmatpush.bf16.msra.mxu0 %v996
    %1066 = vmatpush.bf16.msra.mxu0 %v995
    %1067 = vmatpush.bf16.msra.mxu0 %v994
    %1068 = vmatpush.bf16.msra.mxu0 %v993
    %1069 = vmatpush.bf16.msra.mxu0 %v992
    %1070 = vmatpush.bf16.msra.mxu0 %v991
    %1071 = vmatpush.bf16.msra.mxu0 %v990
    %1072 = vmatpush.bf16.msra.mxu0 %v989
    %1073 = vmatmul.bf16.gmra.mxu0 %v775
    %v1074 = vpop.f32.mrf.mxu0
    %v1075 = vadd.f32 %v1061, %v1074
    %v1076 = vpop.f32.mrf.mxu0
    %v1077 = vadd.f32 %v1063, %v1076
    %1078 = vdwg.mxu0
    %1079 = vmatpush.bf16.msra.mxu0 %v1004
    %1080 = vmatpush.bf16.msra.mxu0 %v1003
    %1081 = vmatpush.bf16.msra.mxu0 %v1002
    %1082 = vmatpush.bf16.msra.mxu0 %v1001
    %1083 = vmatpush.bf16.msra.mxu0 %v1000
    %1084 = vmatpush.bf16.msra.mxu0 %v999
    %1085 = vmatpush.bf16.msra.mxu0 %v998
    %1086 = vmatpush.bf16.msra.mxu0 %v997
    %1087 = vmatmul.bf16.gmra.mxu0 %v776
    %v1088 = vpop.f32.mrf.mxu0
    %v1089 = vadd.f32 %v1075, %v1088
    %v1090 = vpop.f32.mrf.mxu0
    %v1091 = vadd.f32 %v1077, %v1090
    %1092 = vdwg.mxu0
    %1093 = vst [vmem:[#allocation11] sm:$0xff] %v1089
    %1094 = vst [vmem:[#allocation11 + $0x8] sm:$0xff] %v1091
    // Predicated region
    $region50: #{tpu_custom_call.1} parent=1 // pred_check
      _
    $region51: #{tpu_custom_call.1} parent=1 // pred_check_branch
      %1096 = sbr.rel (0) target = $region53
    $region52: #{tpu_custom_call.1} parent=1 // pred_region
      %1098 = vsyncadd [#allocation4], 0
      %s1099 = sshll.u32 [#allocation11], 4
      %s1100 = int_to_ptr.vmem [resolvable:$true] %s1099
      %s1101 = sshll.u32 %s7, 4
      %s1102 = int_to_ptr.hbm [resolvable:$true] %s1101
      %1107 = dma.vmem_to_hbm [thread:$0]  %s1100, 256, %s1102, [#allocation4], 128, 128, 8
    $region53: #{tpu_custom_call.1} parent=1 // pred_fallthru
      _
    // Predicated region
    $region54: #{tpu_custom_call.1} parent=1 // pred_check
      _
    $region55: #{tpu_custom_call.1} parent=1 // pred_check_branch
      %1109 = sbr.rel (0) target = $region57
    $region56: #{tpu_custom_call.1} parent=1 // pred_region
      %1111 = dma.done [#allocation4], 256
    $region57: #{tpu_custom_call.1} parent=1 // pred_fallthru
      _
    %1112 = vsyncpa [#allocation3], 1
    %1113 = vsyncpa [#allocation6], 1
    %1114 = vsyncpa [#allocation9], 1
    %1115 = vsyncpa [#allocation4], 1

</llo_original>
